<compile_context>
chip_gen: v6e
topology: v6e:2x2x1
jax: 0.10.0
libtpu: 0.0.40
codegen_flags: <defaults>
</compile_context>

<pallas_src>
import functools

import jax
import jax.numpy as jnp
from jax.experimental import pallas as pl
from jax.experimental.pallas import tpu as pltpu

IN_FEATURES = 512
OUT_FEATURES = 43
PADDED_CLASSES = 128          # lane-dense class axis inside the kernel

# Tile sizing (rows per grid step).
MAX_BATCH_TILE = 2048         # safe on v7x's 64 MiB VMEM; v6e/v5e may go larger
MIN_BATCH_TILE = 256
MIN_SPLIT_BATCH = 512         # below this a single full-extent block is cheapest
MIN_GRID_STEPS = 4            # >=4 steps -> pipelining + both v7x TCs busy


def _round_up(x: int, m: int) -> int:
    return ((x + m - 1) // m) * m


def _pick_batch_tile(batch: int) -> int:
    if batch < MIN_SPLIT_BATCH:
        # Tiny batch: one full-extent block (always a legal block shape);
        # splitting would only add ~0.35us/step pipeline overhead.
        return batch
    # Force at least MIN_GRID_STEPS grid steps so double-buffering hides the
    # x-tile DMA / output writeback and megacore can shard the batch axis.
    tb = _round_up(pl.cdiv(batch, MIN_GRID_STEPS), 8)
    return max(MIN_BATCH_TILE, min(tb, MAX_BATCH_TILE))


def _classifier_kernel(x_ref, w_ref, b_ref, o_ref, *, use_log_softmax: bool):
    """One batch tile: (TB,512) @ (512,128) + bias -> (log_)softmax -> (TB,43)."""
    # bf16 MXU operands, f32 accumulation. The in-kernel cast is a cheap VPU op
    # and keeps the HBM interface f32 (matching the PyTorch module).
    x = x_ref[...].astype(jnp.bfloat16)          # (TB, 512) bf16
    w = w_ref[...]                               # (512, 128) bf16, cols 43.. zero
    b = b_ref[...]                               # (1, 128) f32,  cols 43.. -inf

    # Padded class columns have zero weights and -inf bias, so they never win
    # the row max and contribute exp(-inf) = 0 to the softmax denominator.
    h = jnp.dot(x, w, preferred_element_type=jnp.float32) + b   # (TB, 128) f32

    # Numerically stable (log_)softmax over the class axis.
    m = jnp.max(h, axis=-1, keepdims=True)       # finite: real classes only
    s = h - m
    e = jnp.exp(s)
    denom = jnp.sum(e, axis=-1, keepdims=True)

    if use_log_softmax:
        out = s - jnp.log(denom)
    else:
        # Exact divide: rows sum to 1.0 to f32 precision; the divide cost is
        # invisible in this HBM-bandwidth-bound kernel.
        out = e / denom

    # Store only the real 43 classes back to HBM (masked 43-lane store; small
    # vs. the 2 KiB/row input stream).
    # TODO(synk): if the consumer is argmax/NLL, fuse it here and emit a
    # lane-dense (TB, 1) result instead of the narrow (TB, 43) block.
    o_ref[...] = out[:, :OUT_FEATURES].astype(o_ref.dtype)


@functools.partial(jax.jit, static_argnames=("use_log_softmax", "batch_tile"))
def classifier_forward(x, w, b, use_log_softmax=True, batch_tile=None):
    """x: (B, 512) f32, w: (512, 43) f32, b: (43,) f32 -> (B, 43) f32."""
    batch = x.shape[0]
    if batch_tile is None:
        tb = _pick_batch_tile(batch)
    elif batch_tile >= batch:
        tb = batch
    else:
        tb = _round_up(batch_tile, 8)
    grid = (pl.cdiv(batch, tb),)

    # Pad the class axis once in the wrapper (tiny: 512x128 bf16 = 128 KiB).
    w_pad = jnp.zeros((IN_FEATURES, PADDED_CLASSES), jnp.bfloat16)
    w_pad = w_pad.at[:, :OUT_FEATURES].set(w.astype(jnp.bfloat16))
    b_pad = jnp.full((1, PADDED_CLASSES), -jnp.inf, jnp.float32)
    b_pad = b_pad.at[0, :OUT_FEATURES].set(b.astype(jnp.float32))

    kernel = functools.partial(_classifier_kernel, use_log_softmax=use_log_softmax)

    # Cost hint reflects the padded 128-column work the kernel actually does.
    bytes_accessed = (
        batch * IN_FEATURES * x.dtype.itemsize           # x read
        + IN_FEATURES * PADDED_CLASSES * 2                # bf16 weights
        + PADDED_CLASSES * 4                              # bias
        + batch * OUT_FEATURES * 4                        # output write
    )
    cost = pl.CostEstimate(
        flops=2 * batch * IN_FEATURES * PADDED_CLASSES,
        transcendentals=batch * PADDED_CLASSES,
        bytes_accessed=bytes_accessed,
    )

    return pl.pallas_call(
        kernel,
        out_shape=jax.ShapeDtypeStruct((batch, OUT_FEATURES), jnp.float32),
        grid=grid,
        in_specs=[
            # Streamed batch tiles (double-buffered by the pipeline).
            pl.BlockSpec((tb, IN_FEATURES), lambda i: (i, 0)),
            # Constant index_map -> fetched once, reused across grid steps.
            # (The spare second buffer is ~256 KiB, negligible vs the 32 MiB
            #  VMEM budget, so pipeline_mode trimming is intentionally omitted.)
            pl.BlockSpec((IN_FEATURES, PADDED_CLASSES), lambda i: (0, 0)),
            pl.BlockSpec((1, PADDED_CLASSES), lambda i: (0, 0)),
        ],
        out_specs=pl.BlockSpec((tb, OUT_FEATURES), lambda i: (i, 0)),
        compiler_params=pltpu.CompilerParams(
            dimension_semantics=("parallel",),   # megacore-shard the batch axis
            vmem_limit_bytes=32 << 20,           # fits v5e/v6e/v7x (64 MiB phys)
        ),
        cost_estimate=cost,
    )(x, w_pad, b_pad)


def init_params(key):
    """Deterministic init matching nn.Linear(512, 43) shapes (Kaiming-uniform-ish)."""
    kw, kb = jax.random.split(key)
    bound = 1.0 / jnp.sqrt(jnp.float32(IN_FEATURES))
    # PyTorch stores weight as (out, in); we store the transpose (in, out)
    # so the kernel computes x @ W directly.
    w = jax.random.uniform(
        kw, (IN_FEATURES, OUT_FEATURES), dtype=jnp.float32, minval=-bound, maxval=bound
    )
    b = jax.random.uniform(
        kb, (OUT_FEATURES,), dtype=jnp.float32, minval=-bound, maxval=bound
    )
    return w, b


if __name__ == "__main__":
    key = jax.random.PRNGKey(0)
    k_x, k_p, k_x2, k_x3 = jax.random.split(key, 4)

    w, b = init_params(k_p)

    # 1) Small-batch case (matches the module's typical usage): single block.
    batch = 2
    x = jax.random.normal(k_x, (batch, IN_FEATURES), dtype=jnp.float32)

    out_log = jax.block_until_ready(classifier_forward(x, w, b, use_log_softmax=True))
    out_sm = jax.block_until_ready(classifier_forward(x, w, b, use_log_softmax=False))

    h_ref = x @ w + b
    ref_log = jax.nn.log_softmax(h_ref, axis=1)
    ref_sm = jax.nn.softmax(h_ref, axis=1)
    assert out_log.shape == (batch, OUT_FEATURES)
    # bf16 MXU operands (f32 accumulation) -> logits differ from the pure-f32
    # reference by O(1e-3..1e-2); tolerances reflect that.
    assert jnp.allclose(out_log, ref_log, atol=3e-2, rtol=3e-2)
    assert jnp.allclose(out_sm, ref_sm, atol=1e-2, rtol=3e-2)
    assert jnp.allclose(jnp.sum(out_sm, axis=1), 1.0, atol=1e-5)

    # 2) Tiled/pipelined path with explicit tile and a partial final block.
    batch2 = 100
    x2 = jax.random.normal(k_x2, (batch2, IN_FEATURES), dtype=jnp.float32)
    out2 = jax.block_until_ready(
        classifier_forward(x2, w, b, use_log_softmax=True, batch_tile=32)
    )
    ref2 = jax.nn.log_softmax(x2 @ w + b, axis=1)
    assert out2.shape == (batch2, OUT_FEATURES)
    assert jnp.allclose(out2, ref2, atol=3e-2, rtol=3e-2)

    # 3) Auto tiling path: batch >= 512 -> multi-step grid (never grid=(1,)),
    #    weights stay VMEM-resident across steps, megacore-shardable axis.
    batch3 = 600
    x3 = jax.random.normal(k_x3, (batch3, IN_FEATURES), dtype=jnp.float32)
    out3 = jax.block_until_ready(classifier_forward(x3, w, b, use_log_softmax=True))
    ref3 = jax.nn.log_softmax(x3 @ w + b, axis=1)
    assert out3.shape == (batch3, OUT_FEATURES)
    assert jnp.allclose(out3, ref3, atol=3e-2, rtol=3e-2)

    print("KERNEL_OK")
</pallas_src>

<mosaic_0001>
module attributes {stable_mosaic.version = 11 : i64} {
  func.func @_classifier_kernel(%arg0: i32, %arg1: memref<2x512xf32, #tpu.memory_space<vmem>>, %arg2: memref<512x128xbf16, #tpu.memory_space<vmem>>, %arg3: memref<1x128xf32, #tpu.memory_space<vmem>>, %arg4: memref<2x43xf32, #tpu.memory_space<vmem>>) attributes {dimension_semantics = [#tpu.dimension_semantics<parallel>], iteration_bounds = array<i64: 1>, scalar_prefetch = 0 : i64, scratch_operands = 0 : i64, tpu.core_type = #tpu.core_type<tc>, window_params = [{transform_indices = @transform_0, window_bounds = array<i64: 2, 512>}, {pipeline_mode = #tpu.pipeline_mode<synchronous>, transform_indices = @transform_1, window_bounds = array<i64: 512, 128>}, {pipeline_mode = #tpu.pipeline_mode<synchronous>, transform_indices = @transform_2, window_bounds = array<i64: 1, 128>}, {transform_indices = @transform_3, window_bounds = array<i64: 2, 43>}]} {
    %c0 = arith.constant 0 : index
    %c0_0 = arith.constant 0 : index
    %0 = vector.load %arg1[%c0, %c0_0] : memref<2x512xf32, #tpu.memory_space<vmem>>, vector<2x512xf32>
    %1 = arith.truncf %0 : vector<2x512xf32> to vector<2x512xbf16>
    %c0_1 = arith.constant 0 : index
    %c0_2 = arith.constant 0 : index
    %2 = vector.load %arg2[%c0_1, %c0_2] : memref<512x128xbf16, #tpu.memory_space<vmem>>, vector<512x128xbf16>
    %c0_3 = arith.constant 0 : index
    %c0_4 = arith.constant 0 : index
    %3 = vector.load %arg3[%c0_3, %c0_4] : memref<1x128xf32, #tpu.memory_space<vmem>>, vector<1x128xf32>
    %cst = arith.constant dense<0.000000e+00> : vector<2x128xf32>
    %4 = tpu.matmul %1, %2, %cst {dimension_numbers = #tpu.dot_dimension_numbers<[1], [0], [0], [1], [0, 0, 1, 1], [], []>} : vector<2x512xbf16>, vector<512x128xbf16>, vector<2x128xf32> -> vector<2x128xf32>
    %5 = vector.broadcast %3 : vector<1x128xf32> to vector<2x128xf32>
    %6 = arith.addf %4, %5 : vector<2x128xf32>
    %cst_5 = arith.constant dense<0xFF800000> : vector<2xf32>
    %7 = vector.multi_reduction <maximumf>, %6, %cst_5 [1] : vector<2x128xf32> to vector<2xf32>
    %8 = vector.shape_cast %7 : vector<2xf32> to vector<2x1xf32>
    %9 = vector.broadcast %8 : vector<2x1xf32> to vector<2x128xf32>
    %10 = arith.subf %6, %9 : vector<2x128xf32>
    %11 = math.exp %10 : vector<2x128xf32>
    %cst_6 = arith.constant dense<0.000000e+00> : vector<2xf32>
    %12 = vector.multi_reduction <add>, %11, %cst_6 [1] : vector<2x128xf32> to vector<2xf32>
    %13 = vector.shape_cast %12 : vector<2xf32> to vector<2x1xf32>
    %14 = math.log %13 : vector<2x1xf32>
    %15 = vector.broadcast %14 : vector<2x1xf32> to vector<2x128xf32>
    %16 = arith.subf %10, %15 : vector<2x128xf32>
    %17 = vector.extract_strided_slice %16 {offsets = [0, 0], sizes = [2, 43], strides = [1, 1]} : vector<2x128xf32> to vector<2x43xf32>
    %c0_7 = arith.constant 0 : index
    %c0_8 = arith.constant 0 : index
    %18 = vector.load %arg4[%c0_7, %c0_8] : memref<2x43xf32, #tpu.memory_space<vmem>>, vector<2x43xf32>
    tpu.vector_store %arg4[%c0_7, %c0_8], %17 {strides = array<i32>} : memref<2x43xf32, #tpu.memory_space<vmem>>, vector<2x43xf32>,
    return
  }
  func.func @transform_0(%arg0: i32) -> (i32, i32) {
    %c0_i32 = arith.constant 0 : i32
    %c0_i32_0 = arith.constant 0 : i32
    return %arg0, %c0_i32 : i32, i32
  }
  func.func @transform_1(%arg0: i32) -> (i32, i32) {
    %c0_i32 = arith.constant 0 : i32
    %c0_i32_0 = arith.constant 0 : i32
    %c0_i32_1 = arith.constant 0 : i32
    return %c0_i32, %c0_i32_0 : i32, i32
  }
  func.func @transform_2(%arg0: i32) -> (i32, i32) {
    %c0_i32 = arith.constant 0 : i32
    %c0_i32_0 = arith.constant 0 : i32
    %c0_i32_1 = arith.constant 0 : i32
    return %c0_i32, %c0_i32_0 : i32, i32
  }
  func.func @transform_3(%arg0: i32) -> (i32, i32) {
    %c0_i32 = arith.constant 0 : i32
    %c0_i32_0 = arith.constant 0 : i32
    return %arg0, %c0_i32 : i32, i32
  }
}

</mosaic_0001>

<llo_original>
// kernel: classifier_forward.1
$region0: #{classifier_forward.1}
  #allocation0 [shape = 'u32[]', space=smem, size = 0x4, offset = 0x4, fixed_abs, tag = 'smem constant byte address 0x4 - core index']
  #allocation1 [shape = 'u32[144,128]{1,0:T(1,128)}', space=vmem, size = 0x12000, scoped, tag = 'internal scratch']
  %s0 = inlined_call_operand.vmem [shape: f32[2,512], index: 0, kind: input, shape index: {}]
  %s1 = inlined_call_operand.vmem [shape: bf16[512,128], index: 1, kind: input, shape index: {}]
  %s2 = inlined_call_operand.vmem [shape: f32[1,128], index: 2, kind: input, shape index: {}]
  %s3 = inlined_call_operand.hbm [shape: f32[2,43], index: 3, kind: output, shape index: {}]
  %s4 = sld [smem:[#allocation0]]
  $region22: #{classifier_forward.1} parent=0
    _
  %s6 = ssub.s32 1, %s4
  %s7 = scalar_select 0, %s6, %s4
  $region1: #{classifier_forward.1} parent=0
    #allocation2 [shape = 'u8[1024]{0}', space=vmem, size = 0x400, scoped, tag = 'output window, operand 0, single buffered']
    #allocation3 [shape = 's32[1]{0}', space=sflag, size = 0x4, scoped, tag = 'scoped memory for classifier_forward.1']
    %8 = vsyncpa [#allocation3], 0
    // Predicated region
    $region2: #{classifier_forward.1} parent=1 // pred_check
      _
    $region3: #{classifier_forward.1} parent=1 // pred_check_branch
      %10 = sbr.rel (0) target = $region5
    $region4: #{classifier_forward.1} parent=1 // pred_region
      _
    $region5: #{classifier_forward.1} parent=1 // pred_fallthru
      _
    // Predicated region
    $region6: #{classifier_forward.1} parent=1 // pred_check
      _
    $region7: #{classifier_forward.1} parent=1 // pred_check_branch
      %12 = sbr.rel (0) target = $region9
    $region8: #{classifier_forward.1} parent=1 // pred_region
      _
    $region9: #{classifier_forward.1} parent=1 // pred_fallthru
      _
    // Predicated region
    $region10: #{classifier_forward.1} parent=1 // pred_check
      _
    $region11: #{classifier_forward.1} parent=1 // pred_check_branch
      %14 = sbr.rel (0) target = $region13
    $region12: #{classifier_forward.1} parent=1 // pred_region
      _
    $region13: #{classifier_forward.1} parent=1 // pred_fallthru
      _
    %v16 = vld [vmem:[%s0] sm:$0xff]
    %v18 = vcombine.high %v16, %v16
    %v20 = vunpack.c.l.s4 1983009808
    %v21 = vunpack.c.0.s8 %v20
    %v22 = vlaneseq
    %v23 = vshrl.u32 %v22, 7
    %v24 = vsub.s32 %v21, %v23
    %v25 = vrot.slane %v16, %v24
    %v27 = vunpack.c.l.s4 1983009808
    %v28 = vunpack.c.0.s8 %v27
    %v29 = vlaneseq
    %v30 = vshrl.u32 %v29, 7
    %v31 = vsub.s32 %v28, %v30
    %v32 = vrot.slane %v18, %v31
    %v33 = vcombine.high %v25, %v25
    %v34 = vcombine.high %v32, %v32
    %v39 = vpack.c.bf16 %v25, %v25
    %v40 = vpack.c.bf16 %v33, %v33
    %v41 = vpack.c.bf16 %v32, %v32
    %v42 = vpack.c.bf16 %v34, %v34
    %v43 = vld [vmem:[%s1] sm:$0xf]
    %v44 = vld [vmem:[%s1 + $0x4] sm:$0xf]
    %v45 = vld [vmem:[%s1 + $0x8] sm:$0xf]
    %v46 = vld [vmem:[%s1 + $0xc] sm:$0xf]
    %v47 = vld [vmem:[%s1 + $0x10] sm:$0xf]
    %v48 = vld [vmem:[%s1 + $0x14] sm:$0xf]
    %v49 = vld [vmem:[%s1 + $0x18] sm:$0xf]
    %v50 = vld [vmem:[%s1 + $0x1c] sm:$0xf]
    %v51 = vld [vmem:[%s1 + $0x20] sm:$0xf]
    %v52 = vld [vmem:[%s1 + $0x24] sm:$0xf]
    %v53 = vld [vmem:[%s1 + $0x28] sm:$0xf]
    %v54 = vld [vmem:[%s1 + $0x2c] sm:$0xf]
    %v55 = vld [vmem:[%s1 + $0x30] sm:$0xf]
    %v56 = vld [vmem:[%s1 + $0x34] sm:$0xf]
    %v57 = vld [vmem:[%s1 + $0x38] sm:$0xf]
    %v58 = vld [vmem:[%s1 + $0x3c] sm:$0xf]
    %v59 = vld [vmem:[%s1 + $0x40] sm:$0xf]
    %v60 = vld [vmem:[%s1 + $0x44] sm:$0xf]
    %v61 = vld [vmem:[%s1 + $0x48] sm:$0xf]
    %v62 = vld [vmem:[%s1 + $0x4c] sm:$0xf]
    %v63 = vld [vmem:[%s1 + $0x50] sm:$0xf]
    %v64 = vld [vmem:[%s1 + $0x54] sm:$0xf]
    %v65 = vld [vmem:[%s1 + $0x58] sm:$0xf]
    %v66 = vld [vmem:[%s1 + $0x5c] sm:$0xf]
    %v67 = vld [vmem:[%s1 + $0x60] sm:$0xf]
    %v68 = vld [vmem:[%s1 + $0x64] sm:$0xf]
    %v69 = vld [vmem:[%s1 + $0x68] sm:$0xf]
    %v70 = vld [vmem:[%s1 + $0x6c] sm:$0xf]
    %v71 = vld [vmem:[%s1 + $0x70] sm:$0xf]
    %v72 = vld [vmem:[%s1 + $0x74] sm:$0xf]
    %v73 = vld [vmem:[%s1 + $0x78] sm:$0xf]
    %v74 = vld [vmem:[%s1 + $0x7c] sm:$0xf]
    %v75 = vld [vmem:[%s1 + $0x80] sm:$0xf]
    %v76 = vld [vmem:[%s1 + $0x84] sm:$0xf]
    %v77 = vld [vmem:[%s1 + $0x88] sm:$0xf]
    %v78 = vld [vmem:[%s1 + $0x8c] sm:$0xf]
    %v79 = vld [vmem:[%s1 + $0x90] sm:$0xf]
    %v80 = vld [vmem:[%s1 + $0x94] sm:$0xf]
    %v81 = vld [vmem:[%s1 + $0x98] sm:$0xf]
    %v82 = vld [vmem:[%s1 + $0x9c] sm:$0xf]
    %v83 = vld [vmem:[%s1 + $0xa0] sm:$0xf]
    %v84 = vld [vmem:[%s1 + $0xa4] sm:$0xf]
    %v85 = vld [vmem:[%s1 + $0xa8] sm:$0xf]
    %v86 = vld [vmem:[%s1 + $0xac] sm:$0xf]
    %v87 = vld [vmem:[%s1 + $0xb0] sm:$0xf]
    %v88 = vld [vmem:[%s1 + $0xb4] sm:$0xf]
    %v89 = vld [vmem:[%s1 + $0xb8] sm:$0xf]
    %v90 = vld [vmem:[%s1 + $0xbc] sm:$0xf]
    %v91 = vld [vmem:[%s1 + $0xc0] sm:$0xf]
    %v92 = vld [vmem:[%s1 + $0xc4] sm:$0xf]
    %v93 = vld [vmem:[%s1 + $0xc8] sm:$0xf]
    %v94 = vld [vmem:[%s1 + $0xcc] sm:$0xf]
    %v95 = vld [vmem:[%s1 + $0xd0] sm:$0xf]
    %v96 = vld [vmem:[%s1 + $0xd4] sm:$0xf]
    %v97 = vld [vmem:[%s1 + $0xd8] sm:$0xf]
    %v98 = vld [vmem:[%s1 + $0xdc] sm:$0xf]
    %v99 = vld [vmem:[%s1 + $0xe0] sm:$0xf]
    %v100 = vld [vmem:[%s1 + $0xe4] sm:$0xf]
    %v101 = vld [vmem:[%s1 + $0xe8] sm:$0xf]
    %v102 = vld [vmem:[%s1 + $0xec] sm:$0xf]
    %v103 = vld [vmem:[%s1 + $0xf0] sm:$0xf]
    %v104 = vld [vmem:[%s1 + $0xf4] sm:$0xf]
    %v105 = vld [vmem:[%s1 + $0xf8] sm:$0xf]
    %v106 = vld [vmem:[%s1 + $0xfc] sm:$0xf]
    %v107 = vld [vmem:[%s2] sm:$0x1]
    %v109 = vlaneseq
    %v110 = vshrl.u32 %v109, 7
    %v111 = vsub.s32 0, %v110
    %v112 = vrot.slane %v107, %v111
    %v178 = vunpack.c.l.b16 %v43
    %v179 = vunpack.c.l.b16 %v44
    %v180 = vunpack.c.l.b16 %v45
    %v181 = vunpack.c.l.b16 %v46
    %v182 = vunpack.c.l.b16 %v47
    %v183 = vunpack.c.l.b16 %v48
    %v184 = vunpack.c.l.b16 %v49
    %v185 = vunpack.c.l.b16 %v50
    %v186 = vunpack.c.l.b16 %v51
    %v187 = vunpack.c.l.b16 %v52
    %v188 = vunpack.c.l.b16 %v53
    %v189 = vunpack.c.l.b16 %v54
    %v190 = vunpack.c.l.b16 %v55
    %v191 = vunpack.c.l.b16 %v56
    %v192 = vunpack.c.l.b16 %v57
    %v193 = vunpack.c.l.b16 %v58
    %v194 = vunpack.c.l.b16 %v59
    %v195 = vunpack.c.l.b16 %v60
    %v196 = vunpack.c.l.b16 %v61
    %v197 = vunpack.c.l.b16 %v62
    %v198 = vunpack.c.l.b16 %v63
    %v199 = vunpack.c.l.b16 %v64
    %v200 = vunpack.c.l.b16 %v65
    %v201 = vunpack.c.l.b16 %v66
    %v202 = vunpack.c.l.b16 %v67
    %v203 = vunpack.c.l.b16 %v68
    %v204 = vunpack.c.l.b16 %v69
    %v205 = vunpack.c.l.b16 %v70
    %v206 = vunpack.c.l.b16 %v71
    %v207 = vunpack.c.l.b16 %v72
    %v208 = vunpack.c.l.b16 %v73
    %v209 = vunpack.c.l.b16 %v74
    %v210 = vunpack.c.l.b16 %v75
    %v211 = vunpack.c.l.b16 %v76
    %v212 = vunpack.c.l.b16 %v77
    %v213 = vunpack.c.l.b16 %v78
    %v214 = vunpack.c.l.b16 %v79
    %v215 = vunpack.c.l.b16 %v80
    %v216 = vunpack.c.l.b16 %v81
    %v217 = vunpack.c.l.b16 %v82
    %v218 = vunpack.c.l.b16 %v83
    %v219 = vunpack.c.l.b16 %v84
    %v220 = vunpack.c.l.b16 %v85
    %v221 = vunpack.c.l.b16 %v86
    %v222 = vunpack.c.l.b16 %v87
    %v223 = vunpack.c.l.b16 %v88
    %v224 = vunpack.c.l.b16 %v89
    %v225 = vunpack.c.l.b16 %v90
    %v226 = vunpack.c.l.b16 %v91
    %v227 = vunpack.c.l.b16 %v92
    %v228 = vunpack.c.l.b16 %v93
    %v229 = vunpack.c.l.b16 %v94
    %v230 = vunpack.c.l.b16 %v95
    %v231 = vunpack.c.l.b16 %v96
    %v232 = vunpack.c.l.b16 %v97
    %v233 = vunpack.c.l.b16 %v98
    %v234 = vunpack.c.l.b16 %v99
    %v235 = vunpack.c.l.b16 %v100
    %v236 = vunpack.c.l.b16 %v101
    %v237 = vunpack.c.l.b16 %v102
    %v238 = vunpack.c.l.b16 %v103
    %v239 = vunpack.c.l.b16 %v104
    %v240 = vunpack.c.l.b16 %v105
    %v241 = vunpack.c.l.b16 %v106
    %v242 = vpack.c.b16 %v179, %v178
    %v243 = vpack.c.b16 %v181, %v180
    %v244 = vpack.c.b16 %v183, %v182
    %v245 = vpack.c.b16 %v185, %v184
    %v246 = vpack.c.b16 %v187, %v186
    %v247 = vpack.c.b16 %v189, %v188
    %v248 = vpack.c.b16 %v191, %v190
    %v249 = vpack.c.b16 %v193, %v192
    %v250 = vpack.c.b16 %v195, %v194
    %v251 = vpack.c.b16 %v197, %v196
    %v252 = vpack.c.b16 %v199, %v198
    %v253 = vpack.c.b16 %v201, %v200
    %v254 = vpack.c.b16 %v203, %v202
    %v255 = vpack.c.b16 %v205, %v204
    %v256 = vpack.c.b16 %v207, %v206
    %v257 = vpack.c.b16 %v209, %v208
    %v258 = vpack.c.b16 %v211, %v210
    %v259 = vpack.c.b16 %v213, %v212
    %v260 = vpack.c.b16 %v215, %v214
    %v261 = vpack.c.b16 %v217, %v216
    %v262 = vpack.c.b16 %v219, %v218
    %v263 = vpack.c.b16 %v221, %v220
    %v264 = vpack.c.b16 %v223, %v222
    %v265 = vpack.c.b16 %v225, %v224
    %v266 = vpack.c.b16 %v227, %v226
    %v267 = vpack.c.b16 %v229, %v228
    %v268 = vpack.c.b16 %v231, %v230
    %v269 = vpack.c.b16 %v233, %v232
    %v270 = vpack.c.b16 %v235, %v234
    %v271 = vpack.c.b16 %v237, %v236
    %v272 = vpack.c.b16 %v239, %v238
    %v273 = vpack.c.b16 %v241, %v240
    %306 = vmatprep.subr.bf16.mxu0 0
    %307 = vmatpush1.bf16.msra.mxu0 %v249
    %308 = vmatprep.subr.bf16.mxu0 0
    %309 = vmatpush1.bf16.msra.mxu0 %v248
    %310 = vmatprep.subr.bf16.mxu0 0
    %311 = vmatpush1.bf16.msra.mxu0 %v247
    %312 = vmatprep.subr.bf16.mxu0 0
    %313 = vmatpush1.bf16.msra.mxu0 %v246
    %314 = vmatprep.subr.bf16.mxu0 0
    %315 = vmatpush1.bf16.msra.mxu0 %v245
    %316 = vmatprep.subr.bf16.mxu0 0
    %317 = vmatpush1.bf16.msra.mxu0 %v244
    %318 = vmatprep.subr.bf16.mxu0 0
    %319 = vmatpush1.bf16.msra.mxu0 %v243
    %320 = vmatprep.subr.bf16.mxu0 0
    %321 = vmatpush1.bf16.msra.mxu0 %v242
    %322 = vmatprep.subr.bf16.mxu0 0
    %323 = vmatpush2.bf16.msra.mxu0 %v257
    %324 = vmatprep.subr.bf16.mxu0 0
    %325 = vmatpush2.bf16.msra.mxu0 %v256
    %326 = vmatprep.subr.bf16.mxu0 0
    %327 = vmatpush2.bf16.msra.mxu0 %v255
    %328 = vmatprep.subr.bf16.mxu0 0
    %329 = vmatpush2.bf16.msra.mxu0 %v254
    %330 = vmatprep.subr.bf16.mxu0 0
    %331 = vmatpush2.bf16.msra.mxu0 %v253
    %332 = vmatprep.subr.bf16.mxu0 0
    %333 = vmatpush2.bf16.msra.mxu0 %v252
    %334 = vmatprep.subr.bf16.mxu0 0
    %335 = vmatpush2.bf16.msra.mxu0 %v251
    %336 = vmatprep.subr.bf16.mxu0 0
    %337 = vmatpush2.bf16.msra.mxu0 %v250
    %338 = vmatprep.mubr.bf16.mxu0 %v40
    %339 = vmatmul.mubr.bf16.gmra.mxu0 %v39
    %v340 = vpop.f32.mrf.mxu0
    %v341 = vadd.f32 %v112, %v340
    %v342 = vpop.f32.mrf.mxu0
    %v343 = vpop.f32.mrf.mxu0
    %v344 = vpop.f32.mrf.mxu0
    %345 = vdwg.mxu0
    %346 = vmatprep.subr.bf16.mxu0 0
    %347 = vmatpush1.bf16.msra.mxu0 %v265
    %348 = vmatprep.subr.bf16.mxu0 0
    %349 = vmatpush1.bf16.msra.mxu0 %v264
    %350 = vmatprep.subr.bf16.mxu0 0
    %351 = vmatpush1.bf16.msra.mxu0 %v263
    %352 = vmatprep.subr.bf16.mxu0 0
    %353 = vmatpush1.bf16.msra.mxu0 %v262
    %354 = vmatprep.subr.bf16.mxu0 0
    %355 = vmatpush1.bf16.msra.mxu0 %v261
    %356 = vmatprep.subr.bf16.mxu0 0
    %357 = vmatpush1.bf16.msra.mxu0 %v260
    %358 = vmatprep.subr.bf16.mxu0 0
    %359 = vmatpush1.bf16.msra.mxu0 %v259
    %360 = vmatprep.subr.bf16.mxu0 0
    %361 = vmatpush1.bf16.msra.mxu0 %v258
    %362 = vmatprep.subr.bf16.mxu0 0
    %363 = vmatpush2.bf16.msra.mxu0 %v273
    %364 = vmatprep.subr.bf16.mxu0 0
    %365 = vmatpush2.bf16.msra.mxu0 %v272
    %366 = vmatprep.subr.bf16.mxu0 0
    %367 = vmatpush2.bf16.msra.mxu0 %v271
    %368 = vmatprep.subr.bf16.mxu0 0
    %369 = vmatpush2.bf16.msra.mxu0 %v270
    %370 = vmatprep.subr.bf16.mxu0 0
    %371 = vmatpush2.bf16.msra.mxu0 %v269
    %372 = vmatprep.subr.bf16.mxu0 0
    %373 = vmatpush2.bf16.msra.mxu0 %v268
    %374 = vmatprep.subr.bf16.mxu0 0
    %375 = vmatpush2.bf16.msra.mxu0 %v267
    %376 = vmatprep.subr.bf16.mxu0 0
    %377 = vmatpush2.bf16.msra.mxu0 %v266
    %378 = vmatprep.mubr.bf16.mxu0 %v42
    %379 = vmatmul.mubr.bf16.gmra.mxu0 %v41
    %v380 = vpop.f32.mrf.mxu0
    %v381 = vadd.f32 %v341, %v380
    %v382 = vpop.f32.mrf.mxu0
    %v383 = vpop.f32.mrf.mxu0
    %v384 = vpop.f32.mrf.mxu0
    %385 = vdwg.mxu0
    %vm386 = vcmask 1041408
    %v387 = vsel %vm386, %v381, -inf
    %388 = vmax.xlane.f32.xlu0 %v387
    %v389 = vpop.xlane.xlu0 %388
    %v390 = vsub.f32 %v381, %v389
    %v391 = vmul.f32 %v390, 1.442695
    %v392 = vpow.pop %v391
    %v393 = vsel %vm386, %v392, 0.0
    %394 = vadd.xlane.f32.xlu0 %v393
    %v395 = vpop.xlane.xlu0 %394
    %v396 = vlog2.pop %v395
    %v397 = vmul.f32 %v396, 0.6931472
    %v398 = vsub.f32 %v390, %v397
    %vm399 = vcmask 345088
    %400 = vst.msk [vmem:[#allocation2] sm:$0x3] %vm399, %v398
    // Predicated region
    $region14: #{classifier_forward.1} parent=1 // pred_check
      _
    $region15: #{classifier_forward.1} parent=1 // pred_check_branch
      %402 = sbr.rel (0) target = $region17
    $region16: #{classifier_forward.1} parent=1 // pred_region
      %s404 = ssub.s32 32, 32
      %405 = vsyncadd [#allocation3], %s404
      %s407 = sshll.u32 [#allocation2], 4
      %s408 = int_to_ptr.vmem [resolvable:$true] %s407
      %410 = dma.vmem_to_hbm [thread:$0]  %s408, 32, %s3, [#allocation3]
    $region17: #{classifier_forward.1} parent=1 // pred_fallthru
      _
    // Predicated region
    $region18: #{classifier_forward.1} parent=1 // pred_check
      _
    $region19: #{classifier_forward.1} parent=1 // pred_check_branch
      %412 = sbr.rel (0) target = $region21
    $region20: #{classifier_forward.1} parent=1 // pred_region
      %413 = dma.done [#allocation3], 32
    $region21: #{classifier_forward.1} parent=1 // pred_fallthru
      _
    %414 = vsyncpa [#allocation3], 1

</llo_original>
